<compile_context>
chip_gen: v7x
topology: tpu7x:2x2x1
jax: 0.10.0
libtpu: 0.0.40
codegen_flags: <defaults>
</compile_context>

<pallas_src>
import math

import jax
import jax.numpy as jnp
from jax.experimental import pallas as pl
from jax.experimental.pallas import tpu as pltpu

LANE = 128
_VMEM_LIMIT = 48 * 1024 * 1024  # fits v7x (64 MiB) and is > the 32 MiB default


# ---------------------------------------------------------------------------
# small helpers
# ---------------------------------------------------------------------------

def _round_up(n, m):
    return ((n + m - 1) // m) * m


def _pad2d(x, rows, cols):
    r, c = x.shape
    if r == rows and c == cols:
        return x
    return jnp.pad(x, ((0, rows - r), (0, cols - c)))


# ---------------------------------------------------------------------------
# stage 1: feature transform  s1 = x @ W1   (small matmul, W1 resident)
# ---------------------------------------------------------------------------

def _feature_transform_kernel(x_ref, w_ref, out_ref):
    x = x_ref[...].astype(jnp.bfloat16)
    w = w_ref[...].astype(jnp.bfloat16)
    out_ref[...] = jnp.dot(
        x, w, preferred_element_type=jnp.float32).astype(out_ref.dtype)


def feature_transform(x, w, *, block_m=128):
    n, k = x.shape
    _, f = w.shape
    cost = pl.CostEstimate(
        flops=2 * n * k * f,
        transcendentals=0,
        bytes_accessed=int(x.size * x.dtype.itemsize
                           + w.size * w.dtype.itemsize + n * f * 2),
    )
    return pl.pallas_call(
        _feature_transform_kernel,
        out_shape=jax.ShapeDtypeStruct((n, f), jnp.bfloat16),
        grid=(n // block_m,),
        in_specs=[
            pl.BlockSpec((block_m, k), lambda i: (i, 0)),
            pl.BlockSpec((k, f), lambda i: (0, 0)),
        ],
        out_specs=pl.BlockSpec((block_m, f), lambda i: (i, 0)),
        compiler_params=pltpu.CompilerParams(
            dimension_semantics=("parallel",),
            vmem_limit_bytes=_VMEM_LIMIT,
        ),
        cost_estimate=cost,
    )(x, w)


# ---------------------------------------------------------------------------
# stage 2: s2 = relu(adj @ s1) @ W2   (layer-1 propagation fused with the
#          layer-2 feature transform; the [N, hidden] `h` never hits HBM)
# ---------------------------------------------------------------------------

def _adj_matmul_fused_w2_kernel(adj_ref, s_ref, w_ref, out_ref, acc_ref):
    k = pl.program_id(1)

    @pl.when(k == 0)
    def _():
        acc_ref[...] = jnp.zeros_like(acc_ref)

    acc_ref[...] += jnp.dot(
        adj_ref[...], s_ref[...], preferred_element_type=jnp.float32)

    @pl.when(k == pl.num_programs(1) - 1)
    def _():
        h = jnp.maximum(acc_ref[...], 0.0).astype(jnp.bfloat16)
        out_ref[...] = jnp.dot(
            h, w_ref[...], preferred_element_type=jnp.float32
        ).astype(out_ref.dtype)


def adj_matmul_relu_w2(adj, s1, w2, *, block_m=128, block_k=128):
    n, _ = adj.shape
    _, hid = s1.shape
    _, out = w2.shape
    cost = pl.CostEstimate(
        flops=2 * n * n * hid + 2 * n * hid * out,
        transcendentals=0,
        bytes_accessed=int(adj.size * adj.dtype.itemsize
                           + s1.size * s1.dtype.itemsize
                           + w2.size * w2.dtype.itemsize
                           + n * out * 2),
    )
    return pl.pallas_call(
        _adj_matmul_fused_w2_kernel,
        out_shape=jax.ShapeDtypeStruct((n, out), jnp.bfloat16),
        grid=(n // block_m, n // block_k),        # reduction (K) axis last
        in_specs=[
            pl.BlockSpec((block_m, block_k), lambda i, k: (i, k)),
            pl.BlockSpec((block_k, hid), lambda i, k: (k, 0)),
            pl.BlockSpec((hid, out), lambda i, k: (0, 0)),
        ],
        out_specs=pl.BlockSpec((block_m, out), lambda i, k: (i, 0)),
        scratch_shapes=[pltpu.VMEM((block_m, hid), jnp.float32)],
        compiler_params=pltpu.CompilerParams(
            dimension_semantics=("parallel", "arbitrary"),
            vmem_limit_bytes=_VMEM_LIMIT,
        ),
        cost_estimate=cost,
    )(adj, s1, w2)


# ---------------------------------------------------------------------------
# stage 3: out = masked_log_softmax(adj @ s2)   (layer-2 propagation fused
#          with the row-wise log_softmax over the real output columns)
# ---------------------------------------------------------------------------

def _masked_log_softmax(acc, valid_cols):
    """log_softmax over axis=1 restricted to the first `valid_cols` lanes."""
    col = jax.lax.broadcasted_iota(jnp.int32, acc.shape, dimension=1)
    mask = col < valid_cols
    zm = jnp.where(mask, acc, jnp.float32(-1e30))
    m = jnp.max(zm, axis=1, keepdims=True)
    shifted = zm - m
    lse = jnp.log(jnp.sum(jnp.exp(shifted), axis=1, keepdims=True))
    return shifted - lse


def _make_adj_logsoftmax_kernel(valid_cols):
    def kernel(adj_ref, s_ref, out_ref, acc_ref):
        k = pl.program_id(1)

        @pl.when(k == 0)
        def _():
            acc_ref[...] = jnp.zeros_like(acc_ref)

        acc_ref[...] += jnp.dot(
            adj_ref[...], s_ref[...], preferred_element_type=jnp.float32)

        @pl.when(k == pl.num_programs(1) - 1)
        def _():
            out_ref[...] = _masked_log_softmax(
                acc_ref[...], valid_cols).astype(out_ref.dtype)

    return kernel


def adj_matmul_logsoftmax(adj, s2, valid_cols, *, block_m=128, block_k=128):
    n, _ = adj.shape
    _, f = s2.shape
    cost = pl.CostEstimate(
        flops=2 * n * n * f,
        transcendentals=int(n * (f + 1)),
        bytes_accessed=int(adj.size * adj.dtype.itemsize
                           + s2.size * s2.dtype.itemsize + n * f * 4),
    )
    return pl.pallas_call(
        _make_adj_logsoftmax_kernel(valid_cols),
        out_shape=jax.ShapeDtypeStruct((n, f), jnp.float32),
        grid=(n // block_m, n // block_k),        # reduction (K) axis last
        in_specs=[
            pl.BlockSpec((block_m, block_k), lambda i, k: (i, k)),
            pl.BlockSpec((block_k, f), lambda i, k: (k, 0)),
        ],
        out_specs=pl.BlockSpec((block_m, f), lambda i, k: (i, 0)),
        scratch_shapes=[pltpu.VMEM((block_m, f), jnp.float32)],
        compiler_params=pltpu.CompilerParams(
            dimension_semantics=("parallel", "arbitrary"),
            vmem_limit_bytes=_VMEM_LIMIT,
        ),
        cost_estimate=cost,
    )(adj, s2)


# ---------------------------------------------------------------------------
# full GCN forward (padding wrapper + 3 pipelined stages)
# ---------------------------------------------------------------------------

def gcn_forward(adj, x, w1, w2, *, block_m=128, block_k=128):
    n, in_dim = x.shape
    hidden = w1.shape[1]
    d_out = w2.shape[1]

    n_pad = _round_up(n, math.lcm(block_m, block_k))
    in_p = _round_up(in_dim, LANE)
    hid_p = _round_up(hidden, LANE)
    out_p = _round_up(d_out, LANE)

    # Lane-dense padding; adj cast to bf16 once (dominant HBM stream).
    adj_p = _pad2d(adj, n_pad, n_pad).astype(jnp.bfloat16)
    x_p = _pad2d(x, n_pad, in_p)
    w1_p = _pad2d(w1, in_p, hid_p)
    w2_p = _pad2d(w2, hid_p, out_p).astype(jnp.bfloat16)

    # ---- layer 1 transform: s1 = x @ W1 ------------------------------------
    s1 = feature_transform(x_p, w1_p, block_m=block_m)

    # ---- layer 1 propagation fused with layer 2 transform ------------------
    #   s2 = relu(adj @ s1) @ W2   (the [N, hidden] `h` stays on-chip)
    s2 = adj_matmul_relu_w2(adj_p, s1, w2_p, block_m=block_m, block_k=block_k)

    # TODO(synk): nn.Dropout between the layers is training-only; implemented
    # as eval-mode identity (deterministic) rather than a random mask.

    # ---- layer 2 propagation fused with log_softmax ------------------------
    out_padded = adj_matmul_logsoftmax(
        adj_p, s2, d_out, block_m=block_m, block_k=block_k)

    return out_padded[:n, :d_out]


def init_gcn_params(key, input_dim, hidden_dim, output_dim):
    """Matches GCNLayer.reset_parameters: U(-std, std), std = sqrt(out_dim)."""
    k1, k2 = jax.random.split(key)
    std1 = math.sqrt(hidden_dim)
    std2 = math.sqrt(output_dim)
    w1 = jax.random.uniform(k1, (input_dim, hidden_dim), jnp.float32,
                            minval=-std1, maxval=std1)
    w2 = jax.random.uniform(k2, (hidden_dim, output_dim), jnp.float32,
                            minval=-std2, maxval=std2)
    return w1, w2


if __name__ == "__main__":
    # Small demo shapes: N=200 nodes (exercises row/K padding to 256),
    # input_dim=16, hidden_dim=32, output_dim=8 (all lane-padded to 128).
    N, input_dim, hidden_dim, output_dim = 200, 16, 32, 8

    key = jax.random.PRNGKey(0)
    k_adj, k_x, k_w = jax.random.split(key, 3)

    # Dense symmetric, row-normalized adjacency (GCN-style propagation matrix).
    a = jax.random.uniform(k_adj, (N, N), jnp.float32)
    a = (a + a.T) * 0.5
    adj = a / jnp.sum(a, axis=1, keepdims=True)
    x = jax.random.normal(k_x, (N, input_dim), jnp.float32)

    w1, w2 = init_gcn_params(k_w, input_dim, hidden_dim, output_dim)

    out = gcn_forward(adj, x, w1, w2)
    out = jax.block_until_ready(out)
    assert out.shape == (N, output_dim)

    # Reference in plain JAX using the SAME mixed precision as the kernel
    # (bf16 MXU inputs, f32 accumulation) so the check isolates kernel logic.
    bf = jnp.bfloat16
    adj_bf = adj.astype(bf)
    s1_ref = jnp.dot(x.astype(bf), w1.astype(bf),
                     preferred_element_type=jnp.float32).astype(bf)
    h_ref = jnp.maximum(
        jnp.dot(adj_bf, s1_ref, preferred_element_type=jnp.float32), 0.0
    ).astype(bf)
    s2_ref = jnp.dot(h_ref, w2.astype(bf),
                     preferred_element_type=jnp.float32).astype(bf)
    z_ref = jnp.dot(adj_bf, s2_ref, preferred_element_type=jnp.float32)
    ref = jax.nn.log_softmax(z_ref, axis=1)

    max_diff = jnp.max(jnp.abs(out - ref))
    assert jnp.allclose(out, ref, atol=5e-2, rtol=5e-2), (
        f"mismatch vs reference: max abs diff {max_diff}")

    print("KERNEL_OK")
</pallas_src>

<mosaic_0001>
module attributes {stable_mosaic.version = 11 : i64} {
  func.func @_feature_transform_kernel(%arg0: i32, %arg1: memref<128x128xf32, #tpu.memory_space<vmem>>, %arg2: memref<128x128xf32, #tpu.memory_space<vmem>>, %arg3: memref<128x128xbf16, #tpu.memory_space<vmem>>) attributes {dimension_semantics = [#tpu.dimension_semantics<parallel>], iteration_bounds = array<i64: 2>, scalar_prefetch = 0 : i64, scratch_operands = 0 : i64, tpu.core_type = #tpu.core_type<tc>, window_params = [{transform_indices = @transform_0, window_bounds = array<i64: 128, 128>}, {pipeline_mode = #tpu.pipeline_mode<synchronous>, transform_indices = @transform_1, window_bounds = array<i64: 128, 128>}, {transform_indices = @transform_2, window_bounds = array<i64: 128, 128>}]} {
    %c0 = arith.constant 0 : index
    %c0_0 = arith.constant 0 : index
    %0 = vector.load %arg1[%c0, %c0_0] : memref<128x128xf32, #tpu.memory_space<vmem>>, vector<128x128xf32>
    %1 = arith.truncf %0 : vector<128x128xf32> to vector<128x128xbf16>
    %c0_1 = arith.constant 0 : index
    %c0_2 = arith.constant 0 : index
    %2 = vector.load %arg2[%c0_1, %c0_2] : memref<128x128xf32, #tpu.memory_space<vmem>>, vector<128x128xf32>
    %3 = arith.truncf %2 : vector<128x128xf32> to vector<128x128xbf16>
    %cst = arith.constant dense<0.000000e+00> : vector<128x128xf32>
    %4 = tpu.matmul %1, %3, %cst {dimension_numbers = #tpu.dot_dimension_numbers<[1], [0], [0], [1], [0, 0, 1, 1], [], []>} : vector<128x128xbf16>, vector<128x128xbf16>, vector<128x128xf32> -> vector<128x128xf32>
    %5 = arith.truncf %4 : vector<128x128xf32> to vector<128x128xbf16>
    %c0_3 = arith.constant 0 : index
    %c0_4 = arith.constant 0 : index
    %6 = vector.load %arg3[%c0_3, %c0_4] : memref<128x128xbf16, #tpu.memory_space<vmem>>, vector<128x128xbf16>
    tpu.vector_store %arg3[%c0_3, %c0_4], %5 {strides = array<i32>} : memref<128x128xbf16, #tpu.memory_space<vmem>>, vector<128x128xbf16>,
    return
  }
  func.func @transform_0(%arg0: i32) -> (i32, i32) {
    %c0_i32 = arith.constant 0 : i32
    %c0_i32_0 = arith.constant 0 : i32
    return %arg0, %c0_i32 : i32, i32
  }
  func.func @transform_1(%arg0: i32) -> (i32, i32) {
    %c0_i32 = arith.constant 0 : i32
    %c0_i32_0 = arith.constant 0 : i32
    %c0_i32_1 = arith.constant 0 : i32
    return %c0_i32, %c0_i32_0 : i32, i32
  }
  func.func @transform_2(%arg0: i32) -> (i32, i32) {
    %c0_i32 = arith.constant 0 : i32
    %c0_i32_0 = arith.constant 0 : i32
    return %arg0, %c0_i32 : i32, i32
  }
}

</mosaic_0001>

<llo_original>
// kernel: tpu_custom_call.1
$region0: #{tpu_custom_call.1}
  #allocation0 [shape = 'u32[]', space=smem, size = 0x4, offset = 0x4, fixed_abs, tag = 'smem constant byte address 0x4 - core index']
  #allocation1 [shape = 'u32[144,128]{1,0:T(1,128)}', space=vmem, size = 0x12000, scoped, tag = 'internal scratch']
  %s0 = inlined_call_operand.hbm [shape: f32[256,128], index: 0, kind: input, shape index: {}]
  %s1 = inlined_call_operand.hbm [shape: f32[128,128], index: 1, kind: input, shape index: {}]
  %s2 = inlined_call_operand.hbm [shape: bf16[256,128], index: 2, kind: output, shape index: {}]
  %s3 = sld [smem:[#allocation0]]
  $region49: #{tpu_custom_call.1} parent=0
    _
  %s5 = ssub.s32 1, %s3
  %s6 = scalar_select 0, %s5, %s3
  $region1: #{tpu_custom_call.1} parent=0
    #allocation2 [shape = 'u8[131072]{0}', space=vmem, size = 0x20000, scoped, tag = 'input window, operand 0']
    #allocation3 [shape = 's32[2]{0}', space=sflag, size = 0x8, scoped, tag = 'scoped memory for tpu_custom_call.1']
    #allocation4 [shape = 's32[2]{0}', space=sflag, size = 0x8, scoped, tag = 'scoped memory for tpu_custom_call.1']
    #allocation5 [shape = 'u8[65536]{0}', space=vmem, size = 0x10000, scoped, tag = 'input window, operand 1, single buffered']
    #allocation6 [shape = 's32[1]{0}', space=sflag, size = 0x4, scoped, tag = 'scoped memory for tpu_custom_call.1']
    #allocation7 [shape = 'u8[65536]{0}', space=vmem, size = 0x10000, scoped, tag = 'output window, operand 0']
    %7 = vsyncpa [#allocation3], 0
    %s8 = scalar_lea.sflag [#allocation3], 1
    %9 = vsyncpa %s8, 0
    %10 = vsyncpa [#allocation6], 0
    %11 = vsyncpa [#allocation4], 0
    %s12 = scalar_lea.sflag [#allocation4], 1
    %13 = vsyncpa %s12, 0
    loop: start=0, step=1, limit=4
    $region2: #{tpu_custom_call.1} parent=1 // loop_pre_header
      _
    $region3: #{tpu_custom_call.1} parent=1 // loop_header
      %s15 = sphi 0, %s19
      %p16 = scmp.ge.s32.totalorder %s15, 4
      %s25 = sphi 0, %s27
      %s28 = sphi 0, %s25
      %s29 = sphi 0, %s28
      %s45 = sphi 0, %s29
      %s49 = sphi 0, %s49
      %s51 = sphi 0, %s49
      %s52 = sphi 0, %s51
      %s66 = sphi 0, %s52
      %s72 = sphi 0, %s74
      %s75 = sphi 0, %s72
      %s76 = sphi 0, %s75
      %s92 = sphi 0, %s76
    $region4: #{tpu_custom_call.1} parent=1 // loop_header_branch
      %18 = sbr.rel (%p16) target = $region8
    $region5: #{tpu_custom_call.1} parent=1 // loop_body
      %s20 = ssub.s32 %s15, 1
      %s21 = ssub.s32 %s15, 2
      %s22 = sadd.s32 %s15, 1
      %s23 = ssub.s32 %s15, %s22
      %p24 = scmp.eq.s32.totalorder %s23, 0
      %s26 = sadd.s32 %s25, 1
      %s27 = scalar_select %p24, %s25, %s26
      %p30 = pneg %p24
      %p31 = scmp.eq.s32.totalorder %s15, 1
      %p32 = por %p30, %p31
      %p33 = scmp.ne.s32.totalorder %s25, %s28
      %p34 = scmp.eq.s32.totalorder %s15, 0
      %p35 = por %p33, %p34
      %p36 = scmp.ne.s32.totalorder %s25, %s28
      %p37 = scmp.eq.s32.totalorder %s20, 1
      %p38 = por %p36, %p37
      %p39 = scmp.ne.s32.totalorder %s28, %s29
      %p40 = scmp.eq.s32.totalorder %s20, 0
      %p41 = por %p39, %p40
      %p42 = scmp.ne.s32.totalorder %s28, %s29
      %p43 = scmp.eq.s32.totalorder %s21, 1
      %p44 = por %p42, %p43
      %p46 = scmp.ne.s32.totalorder %s29, %s45
      %p47 = scmp.eq.s32.totalorder %s21, 0
      %p48 = por %p46, %p47
      %s50 = sadd.s32 %s49, 1
      %p53 = scmp.eq.s32.totalorder %s15, 1
      %p54 = scmp.ne.s32.totalorder %s49, %s51
      %p55 = scmp.eq.s32.totalorder %s15, 0
      %p56 = por %p54, %p55
      %p57 = scmp.ne.s32.totalorder %s49, %s51
      %p58 = scmp.eq.s32.totalorder %s20, 1
      %p59 = por %p57, %p58
      %p60 = scmp.ne.s32.totalorder %s51, %s52
      %p61 = scmp.eq.s32.totalorder %s20, 0
      %p62 = por %p60, %p61
      %p63 = scmp.ne.s32.totalorder %s51, %s52
      %p64 = scmp.eq.s32.totalorder %s21, 1
      %p65 = por %p63, %p64
      %p67 = scmp.ne.s32.totalorder %s52, %s66
      %p68 = scmp.eq.s32.totalorder %s21, 0
      %p69 = por %p67, %p68
      %s70 = ssub.s32 %s15, %s22
      %p71 = scmp.eq.s32.totalorder %s70, 0
      %s73 = sadd.s32 %s72, 1
      %s74 = scalar_select %p71, %s72, %s73
      %p77 = pneg %p71
      %p78 = scmp.eq.s32.totalorder %s15, 1
      %p79 = por %p77, %p78
      %p80 = scmp.ne.s32.totalorder %s72, %s75
      %p81 = scmp.eq.s32.totalorder %s15, 0
      %p82 = por %p80, %p81
      %p83 = scmp.ne.s32.totalorder %s72, %s75
      %p84 = scmp.eq.s32.totalorder %s20, 1
      %p85 = por %p83, %p84
      %p86 = scmp.ne.s32.totalorder %s75, %s76
      %p87 = scmp.eq.s32.totalorder %s20, 0
      %p88 = por %p86, %p87
      %p89 = scmp.ne.s32.totalorder %s75, %s76
      %p90 = scmp.eq.s32.totalorder %s21, 1
      %p91 = por %p89, %p90
      %p93 = scmp.ne.s32.totalorder %s76, %s92
      %p94 = scmp.eq.s32.totalorder %s21, 0
      %p95 = por %p93, %p94
      %p96 = scmp.le.s32.totalorder 1, %s15
      %p97 = scmp.lt.s32.totalorder %s15, 3
      %p98 = pnand %p96, %p97
      %p99 = pneg %p98
      // Predicated region
      $region9: #{tpu_custom_call.1} parent=5 // pred_check
        _
      $region10: #{tpu_custom_call.1} parent=5 // pred_check_branch
        %101 = sbr.rel (%p98) target = $region12
      $region11: #{tpu_custom_call.1} parent=5 // pred_region
        %s102 = ssub.s32 %s15, 1
        // Predicated region
        $region13: #{tpu_custom_call.1} parent=11 // pred_check
          %p103 = pneg %p62
        $region14: #{tpu_custom_call.1} parent=11 // pred_check_branch
          %105 = sbr.rel (%p103) target = $region16
        $region15: #{tpu_custom_call.1} parent=11 // pred_region
          %s107 = ssub.s32 2048, 2048
          %108 = vsyncadd [#allocation6], %s107
          %s109 = sshll.u32 [#allocation5], 4
          %s110 = int_to_ptr.vmem [resolvable:$true] %s109
          %115 = dma.hbm_to_vmem [thread:$0]  %s1, 2048, %s110, [#allocation6], 128, 128, 8
        $region16: #{tpu_custom_call.1} parent=11 // pred_fallthru
          _
      $region12: #{tpu_custom_call.1} parent=5 // pred_fallthru
        _
      %p116 = scmp.lt.s32.totalorder %s15, 2
      // Predicated region
      $region17: #{tpu_custom_call.1} parent=5 // pred_check
        %p117 = pneg %p116
      $region18: #{tpu_custom_call.1} parent=5 // pred_check_branch
        %119 = sbr.rel (%p117) target = $region20
      $region19: #{tpu_custom_call.1} parent=5 // pred_region
        // Predicated region
        $region21: #{tpu_custom_call.1} parent=19 // pred_check
          %p120 = pneg %p35
        $region22: #{tpu_custom_call.1} parent=19 // pred_check_branch
          %122 = sbr.rel (%p120) target = $region24
        $region23: #{tpu_custom_call.1} parent=19 // pred_region
          %s123 = sand.u32 %s25, 1
          %s124 = scalar_lea.sflag [#allocation3], %s123
          %s125 = sand.u32 %s25, 1
          %s126 = smul.addr %s125, 128
          %s127 = scalar_lea.vmem [#allocation2], %s126
          %s128 = smul.u32 16, %s15
          %s130 = ssub.s32 2048, 2048
          %131 = vsyncadd %s124, %s130
          %s132 = smul.addr %s128, 128
          %s133 = scalar_lea.hbm %s0, %s132
          %s134 = sshll.u32 %s127, 4
          %s135 = int_to_ptr.vmem [resolvable:$true] %s134
          %140 = dma.hbm_to_vmem [thread:$0]  %s133, 2048, %s135, %s124, 128, 128, 8
        $region24: #{tpu_custom_call.1} parent=19 // pred_fallthru
          _
      $region20: #{tpu_custom_call.1} parent=5 // pred_fallthru
        _
      %p141 = scmp.le.s32.totalorder 1, %s15
      %p142 = scmp.lt.s32.totalorder %s15, 3
      %p143 = pnand %p141, %p142
      %p144 = pneg %p143
      // Predicated region
      $region25: #{tpu_custom_call.1} parent=5 // pred_check
        _
      $region26: #{tpu_custom_call.1} parent=5 // pred_check_branch
        %146 = sbr.rel (%p143) target = $region28
      $region27: #{tpu_custom_call.1} parent=5 // pred_region
        %s147 = ssub.s32 %s15, 1
        %s148 = sand.u32 %s28, 1
        %s149 = scalar_lea.sflag [#allocation3], %s148
        %s150 = sand.u32 %s28, 1
        %s151 = smul.addr %s150, 128
        %s152 = scalar_lea.vmem [#allocation2], %s151
        // Predicated region
        $region29: #{tpu_custom_call.1} parent=27 // pred_check
          %p153 = pneg %p41
        $region30: #{tpu_custom_call.1} parent=27 // pred_check_branch
          %155 = sbr.rel (%p153) target = $region32
        $region31: #{tpu_custom_call.1} parent=27 // pred_region
          %156 = dma.done %s149, 2048
        $region32: #{tpu_custom_call.1} parent=27 // pred_fallthru
          _
        // Predicated region
        $region33: #{tpu_custom_call.1} parent=27 // pred_check
          %p157 = pneg %p62
        $region34: #{tpu_custom_call.1} parent=27 // pred_check_branch
          %159 = sbr.rel (%p157) target = $region36
        $region35: #{tpu_custom_call.1} parent=27 // pred_region
          %160 = dma.done [#allocation6], 2048
        $region36: #{tpu_custom_call.1} parent=27 // pred_fallthru
          _
        %s161 = sand.u32 %s28, 1
        %s162 = scalar_lea.sflag [#allocation3], %s161
        %s163 = sand.u32 %s28, 1
        %s164 = smul.addr %s163, 128
        %s165 = scalar_lea.vmem [#allocation2], %s164
        %p166 = pneg %p41
        %p167 = pneg %p38
        %p168 = pneg %p62
        %p169 = pneg %p59
        %p170 = pneg %p88
        %p171 = pneg %p85
        %s172 = sand.u32 %s75, 1
        %s173 = scalar_lea.sflag [#allocation4], %s172
        %s174 = sand.u32 %s75, 1
        %s175 = smul.addr %s174, 64
        %s176 = scalar_lea.vmem [#allocation7], %s175
        %s177 = smul.u32 16, %s20
        %s178 = smul.u32 16, %s20
        %v180 = vld [vmem:[%s152] sm:$0xff]
        %v181 = vld [vmem:[%s152 + $0x8] sm:$0xff]
        %v182 = vld [vmem:[%s152 + $0x10] sm:$0xff]
        %v183 = vld [vmem:[%s152 + $0x18] sm:$0xff]
        %v184 = vld [vmem:[%s152 + $0x20] sm:$0xff]
        %v185 = vld [vmem:[%s152 + $0x28] sm:$0xff]
        %v186 = vld [vmem:[%s152 + $0x30] sm:$0xff]
        %v187 = vld [vmem:[%s152 + $0x38] sm:$0xff]
        %v188 = vld [vmem:[%s152 + $0x40] sm:$0xff]
        %v189 = vld [vmem:[%s152 + $0x48] sm:$0xff]
        %v190 = vld [vmem:[%s152 + $0x50] sm:$0xff]
        %v191 = vld [vmem:[%s152 + $0x58] sm:$0xff]
        %v192 = vld [vmem:[%s152 + $0x60] sm:$0xff]
        %v193 = vld [vmem:[%s152 + $0x68] sm:$0xff]
        %v194 = vld [vmem:[%s152 + $0x70] sm:$0xff]
        %v195 = vld [vmem:[%s152 + $0x78] sm:$0xff]
        %v196 = vpack.c.bf16 %v181, %v180
        %v197 = vpack.c.bf16 %v183, %v182
        %v198 = vpack.c.bf16 %v185, %v184
        %v199 = vpack.c.bf16 %v187, %v186
        %v200 = vpack.c.bf16 %v189, %v188
        %v201 = vpack.c.bf16 %v191, %v190
        %v202 = vpack.c.bf16 %v193, %v192
        %v203 = vpack.c.bf16 %v195, %v194
        %v204 = vld [vmem:[#allocation5] sm:$0xff]
        %v205 = vld [vmem:[#allocation5 + $0x8] sm:$0xff]
        %v206 = vld [vmem:[#allocation5 + $0x10] sm:$0xff]
        %v207 = vld [vmem:[#allocation5 + $0x18] sm:$0xff]
        %v208 = vld [vmem:[#allocation5 + $0x20] sm:$0xff]
        %v209 = vld [vmem:[#allocation5 + $0x28] sm:$0xff]
        %v210 = vld [vmem:[#allocation5 + $0x30] sm:$0xff]
        %v211 = vld [vmem:[#allocation5 + $0x38] sm:$0xff]
        %v212 = vld [vmem:[#allocation5 + $0x40] sm:$0xff]
        %v213 = vld [vmem:[#allocation5 + $0x48] sm:$0xff]
        %v214 = vld [vmem:[#allocation5 + $0x50] sm:$0xff]
        %v215 = vld [vmem:[#allocation5 + $0x58] sm:$0xff]
        %v216 = vld [vmem:[#allocation5 + $0x60] sm:$0xff]
        %v217 = vld [vmem:[#allocation5 + $0x68] sm:$0xff]
        %v218 = vld [vmem:[#allocation5 + $0x70] sm:$0xff]
        %v219 = vld [vmem:[#allocation5 + $0x78] sm:$0xff]
        %v220 = vpack.c.bf16 %v205, %v204
        %v221 = vpack.c.bf16 %v207, %v206
        %v222 = vpack.c.bf16 %v209, %v208
        %v223 = vpack.c.bf16 %v211, %v210
        %v224 = vpack.c.bf16 %v213, %v212
        %v225 = vpack.c.bf16 %v215, %v214
        %v226 = vpack.c.bf16 %v217, %v216
        %v227 = vpack.c.bf16 %v219, %v218
        %228 = vmatprep.subr.bf16.mxu0 0
        %229 = vmatpush1.bf16.msra.mxu0 %v220
        %230 = vmatprep.subr.bf16.mxu0 0
        %231 = vmatpush1.bf16.msra.mxu0 %v221
        %232 = vmatprep.subr.bf16.mxu0 0
        %233 = vmatpush1.bf16.msra.mxu0 %v222
        %234 = vmatprep.subr.bf16.mxu0 0
        %235 = vmatpush1.bf16.msra.mxu0 %v223
        %236 = vmatprep.subr.bf16.mxu0 0
        %237 = vmatpush1.bf16.msra.mxu0 %v224
        %238 = vmatprep.subr.bf16.mxu0 0
        %239 = vmatpush1.bf16.msra.mxu0 %v225
        %240 = vmatprep.subr.bf16.mxu0 0
        %241 = vmatpush1.bf16.msra.mxu0 %v226
        %242 = vmatprep.subr.bf16.mxu0 0
        %243 = vmatpush1.bf16.msra.mxu0 %v227
        %244 = vmatprep.subr.bf16.mxu0 0
        %245 = vmatpush1.bf16.msra.mxu0 0
        %246 = vmatprep.subr.bf16.mxu0 0
        %247 = vmatpush1.bf16.msra.mxu0 0
        %248 = vmatprep.subr.bf16.mxu0 0
        %249 = vmatpush1.bf16.msra.mxu0 0
        %250 = vmatprep.subr.bf16.mxu0 0
        %251 = vmatpush1.bf16.msra.mxu0 0
        %252 = vmatprep.subr.bf16.mxu0 0
        %253 = vmatpush1.bf16.msra.mxu0 0
        %254 = vmatprep.subr.bf16.mxu0 0
        %255 = vmatpush1.bf16.msra.mxu0 0
        %256 = vmatprep.subr.bf16.mxu0 0
        %257 = vmatpush1.bf16.msra.mxu0 0
        %258 = vmatprep.subr.bf16.mxu0 0
        %259 = vmatpush1.bf16.msra.mxu0 0
        %260 = vmatprep.mubr.bf16.mxu0 0
        %261 = vmatmul.mubr.bf16.gmra.mrb[0].mxu0 %v196
        %v262 = vpop.f32.mrb[0].mxu0
        %v263 = vadd.f32 0.0, %v262
        %v264 = vpop.f32.mrb[0].mxu0
        %v265 = vpop.f32.mrb[0].mxu0
        %v266 = vadd.f32 0.0, %v265
        %v267 = vpop.f32.mrb[0].mxu0
        %268 = vmatprep.mubr.bf16.mxu0 0
        %269 = vmatmul.mubr.bf16.gmra.mrb[0].mxu0 %v197
        %v270 = vpop.f32.mrb[0].mxu0
        %v271 = vadd.f32 0.0, %v270
        %v272 = vpop.f32.mrb[0].mxu0
        %v273 = vpop.f32.mrb[0].mxu0
        %v274 = vadd.f32 0.0, %v273
        %v275 = vpop.f32.mrb[0].mxu0
        %276 = vmatprep.mubr.bf16.mxu0 0
        %277 = vmatmul.mubr.bf16.gmra.mrb[0].mxu0 %v198
        %v278 = vpop.f32.mrb[0].mxu0
        %v279 = vadd.f32 0.0, %v278
        %v280 = vpop.f32.mrb[0].mxu0
        %v281 = vpop.f32.mrb[0].mxu0
        %v282 = vadd.f32 0.0, %v281
        %v283 = vpop.f32.mrb[0].mxu0
        %284 = vmatprep.mubr.bf16.mxu0 0
        %285 = vmatmul.mubr.bf16.gmra.mrb[0].mxu0 %v199
        %v286 = vpop.f32.mrb[0].mxu0
        %v287 = vadd.f32 0.0, %v286
        %v288 = vpop.f32.mrb[0].mxu0
        %v289 = vpop.f32.mrb[0].mxu0
        %v290 = vadd.f32 0.0, %v289
        %v291 = vpop.f32.mrb[0].mxu0
        %292 = vmatprep.mubr.bf16.mxu0 0
        %293 = vmatmul.mubr.bf16.gmra.mrb[0].mxu0 %v200
        %v294 = vpop.f32.mrb[0].mxu0
        %v295 = vadd.f32 0.0, %v294
        %v296 = vpop.f32.mrb[0].mxu0
        %v297 = vpop.f32.mrb[0].mxu0
        %v298 = vadd.f32 0.0, %v297
        %v299 = vpop.f32.mrb[0].mxu0
        %300 = vmatprep.mubr.bf16.mxu0 0
        %301 = vmatmul.mubr.bf16.gmra.mrb[0].mxu0 %v201
        %v302 = vpop.f32.mrb[0].mxu0
        %v303 = vadd.f32 0.0, %v302
        %v304 = vpop.f32.mrb[0].mxu0
        %v305 = vpop.f32.mrb[0].mxu0
        %v306 = vadd.f32 0.0, %v305
        %v307 = vpop.f32.mrb[0].mxu0
        %308 = vmatprep.mubr.bf16.mxu0 0
        %309 = vmatmul.mubr.bf16.gmra.mrb[0].mxu0 %v202
        %v310 = vpop.f32.mrb[0].mxu0
        %v311 = vadd.f32 0.0, %v310
        %v312 = vpop.f32.mrb[0].mxu0
        %v313 = vpop.f32.mrb[0].mxu0
        %v314 = vadd.f32 0.0, %v313
        %v315 = vpop.f32.mrb[0].mxu0
        %316 = vmatprep.mubr.bf16.mxu0 0
        %317 = vmatmul.mubr.bf16.gmra.mrb[0].mxu0 %v203
        %v318 = vpop.f32.mrb[0].mxu0
        %v319 = vadd.f32 0.0, %v318
        %v320 = vpop.f32.mrb[0].mxu0
        %v321 = vpop.f32.mrb[0].mxu0
        %v322 = vadd.f32 0.0, %v321
        %v323 = vpop.f32.mrb[0].mxu0
        %324 = vdwg.mxu0
        %v325 = vpack.c.bf16 %v266, %v263
        %v326 = vpack.c.bf16 %v274, %v271
        %v327 = vpack.c.bf16 %v282, %v279
        %v328 = vpack.c.bf16 %v290, %v287
        %v329 = vpack.c.bf16 %v298, %v295
        %v330 = vpack.c.bf16 %v306, %v303
        %v331 = vpack.c.bf16 %v314, %v311
        %v332 = vpack.c.bf16 %v322, %v319
        %v341 = vunpack.c.l.b16 %v325
        %v342 = vunpack.c.h.b16 %v325
        %v343 = vunpack.c.l.b16 %v326
        %v344 = vunpack.c.h.b16 %v326
        %v345 = vunpack.c.l.b16 %v327
        %v346 = vunpack.c.h.b16 %v327
        %v347 = vunpack.c.l.b16 %v328
        %v348 = vunpack.c.h.b16 %v328
        %v349 = vunpack.c.l.b16 %v329
        %v350 = vunpack.c.h.b16 %v329
        %v351 = vunpack.c.l.b16 %v330
        %v352 = vunpack.c.h.b16 %v330
        %v353 = vunpack.c.l.b16 %v331
        %v354 = vunpack.c.h.b16 %v331
        %v355 = vunpack.c.l.b16 %v332
        %v356 = vunpack.c.h.b16 %v332
        %v357 = vpack.c.b16 %v341, %v341
        %v358 = vpack.c.b16 %v342, %v342
        %v359 = vpack.c.b16 %v343, %v343
        %v360 = vpack.c.b16 %v344, %v344
        %v361 = vpack.c.b16 %v345, %v345
        %v362 = vpack.c.b16 %v346, %v346
        %v363 = vpack.c.b16 %v347, %v347
        %v364 = vpack.c.b16 %v348, %v348
        %v365 = vpack.c.b16 %v349, %v349
        %v366 = vpack.c.b16 %v350, %v350
        %v367 = vpack.c.b16 %v351, %v351
        %v368 = vpack.c.b16 %v352, %v352
        %v369 = vpack.c.b16 %v353, %v353
        %v370 = vpack.c.b16 %v354, %v354
        %v371 = vpack.c.b16 %v355, %v355
        %v372 = vpack.c.b16 %v356, %v356
        %389 = vst [vmem:[%s176] sm:$0xf] %v357
        %390 = vst [vmem:[%s176 + $0x4] sm:$0xf] %v358
        %391 = vst [vmem:[%s176 + $0x8] sm:$0xf] %v359
        %392 = vst [vmem:[%s176 + $0xc] sm:$0xf] %v360
        %393 = vst [vmem:[%s176 + $0x10] sm:$0xf] %v361
        %394 = vst [vmem:[%s176 + $0x14] sm:$0xf] %v362
        %395 = vst [vmem:[%s176 + $0x18] sm:$0xf] %v363
        %396 = vst [vmem:[%s176 + $0x1c] sm:$0xf] %v364
        %397 = vst [vmem:[%s176 + $0x20] sm:$0xf] %v365
        %398 = vst [vmem:[%s176 + $0x24] sm:$0xf] %v366
        %399 = vst [vmem:[%s176 + $0x28] sm:$0xf] %v367
        %400 = vst [vmem:[%s176 + $0x2c] sm:$0xf] %v368
        %401 = vst [vmem:[%s176 + $0x30] sm:$0xf] %v369
        %402 = vst [vmem:[%s176 + $0x34] sm:$0xf] %v370
        %403 = vst [vmem:[%s176 + $0x38] sm:$0xf] %v371
        %404 = vst [vmem:[%s176 + $0x3c] sm:$0xf] %v372
        %s405 = sand.u32 %s75, 1
        %s406 = scalar_lea.sflag [#allocation4], %s405
        %s407 = sand.u32 %s75, 1
        %s408 = smul.addr %s407, 64
        %s409 = scalar_lea.vmem [#allocation7], %s408
        // Predicated region
        $region37: #{tpu_custom_call.1} parent=27 // pred_check
          %p410 = pneg %p85
        $region38: #{tpu_custom_call.1} parent=27 // pred_check_branch
          %412 = sbr.rel (%p410) target = $region40
        $region39: #{tpu_custom_call.1} parent=27 // pred_region
          %s413 = smul.u32 16, %s20
          %s415 = ssub.s32 1024, 1024
          %416 = vsyncadd %s406, %s415
          %s417 = smul.addr %s413, 64
          %s418 = scalar_lea.hbm %s2, %s417
          %s419 = sshll.u32 %s409, 4
          %s420 = int_to_ptr.vmem [resolvable:$true] %s419
          %425 = dma.vmem_to_hbm [thread:$0]  %s420, 1024, %s418, %s406, 64, 64, 4
        $region40: #{tpu_custom_call.1} parent=27 // pred_fallthru
          _
      $region28: #{tpu_custom_call.1} parent=5 // pred_fallthru
        _
      %p426 = scmp.le.s32.totalorder 2, %s15
      // Predicated region
      $region41: #{tpu_custom_call.1} parent=5 // pred_check
        %p427 = pneg %p426
      $region42: #{tpu_custom_call.1} parent=5 // pred_check_branch
        %429 = sbr.rel (%p427) target = $region44
      $region43: #{tpu_custom_call.1} parent=5 // pred_region
        %s430 = ssub.s32 %s15, 2
        // Predicated region
        $region45: #{tpu_custom_call.1} parent=43 // pred_check
          %p431 = pneg %p91
        $region46: #{tpu_custom_call.1} parent=43 // pred_check_branch
          %433 = sbr.rel (%p431) target = $region48
        $region47: #{tpu_custom_call.1} parent=43 // pred_region
          %s434 = sand.u32 %s76, 1
          %s435 = scalar_lea.sflag [#allocation4], %s434
          %s436 = sand.u32 %s76, 1
          %s437 = smul.addr %s436, 64
          %s438 = scalar_lea.vmem [#allocation7], %s437
          %439 = dma.done %s435, 1024
        $region48: #{tpu_custom_call.1} parent=43 // pred_fallthru
          _
      $region44: #{tpu_custom_call.1} parent=5 // pred_fallthru
        _
    $region6: #{tpu_custom_call.1} parent=1 // loop_footer
      %s19 = sadd.s32 1, %s15
    $region7: #{tpu_custom_call.1} parent=1 // loop_footer_branch
      %14 = sbr.rel target = $region3
    $region8: #{tpu_custom_call.1} parent=1 // loop_exit
      _
    %440 = vsyncpa [#allocation3], 1
    %s441 = scalar_lea.sflag [#allocation3], 1
    %442 = vsyncpa %s441, 1
    %443 = vsyncpa [#allocation6], 1
    %444 = vsyncpa [#allocation4], 1
    %s445 = scalar_lea.sflag [#allocation4], 1
    %446 = vsyncpa %s445, 1

</llo_original>
